<compile_context>
chip_gen: v7x
topology: tpu7x:2x2x1
jax: 0.10.0
libtpu: 0.0.40
codegen_flags: <defaults>
</compile_context>

<pallas_src>
import functools

import jax
import jax.numpy as jnp
from jax.experimental import pallas as pl
from jax.experimental.pallas import tpu as pltpu


def _round_up(x, m):
    return (x + m - 1) // m * m


def _vmem_capacity_bytes():
    """Physical VMEM per TensorCore (64 MiB on v7x, 128 MiB on v5e/v6e)."""
    try:
        cap = getattr(pltpu.get_tpu_info(), "vmem_capacity_bytes", None)
        if cap:
            return int(cap)
    except Exception:
        pass
    return 64 * 1024 * 1024  # conservative fallback (v7x)


def _choose_block_l(seq_len, halo, requested, c_in, itemsize, vmem_phys):
    """Lane-dense L tile sized by a per-tile byte budget.

    Targets ~1 MiB (2 MiB on 128-MiB-VMEM chips) of x per tile so DMAs are
    long and the ~0.35 us per-grid-step overhead is amortised.  Whenever more
    than one tile is used, the tile is forced >= halo so one tile's tail can
    always supply the carried causal halo.
    """
    if requested is not None:
        tl = _round_up(max(int(requested), 128), 128)
    else:
        budget = (2 << 20) if vmem_phys > (96 << 20) else (1 << 20)
        tl = _round_up(max(budget // max(c_in * itemsize, 1), 128), 128)
        tl = min(tl, 32768)
    if tl >= seq_len:
        return seq_len
    tl = max(tl, _round_up(max(halo, 1), 128))  # carry needs tl >= halo
    return seq_len if tl >= seq_len else tl


def _causal_conv1d_kernel(x_ref, w_ref, b_ref, o_ref, *scratch, kernel_size,
                          dilation, groups, depthwise, halo, halo_pad, carry,
                          scratch_dtype):
    """One (batch, channel-block, L-tile) grid step.

    x_ref : (C, TL)              current (un-padded) input tile
    w_ref : (C_out, K*C_in//g)   weight, K folded k-major into the contraction
    b_ref : (C_out, 1)           fp32 bias
    o_ref : (C_out, TL)          output tile
    scratch[0] (if halo > 0): (C, halo_pad + TL) persistent window buffer; its
      leftmost halo_pad columns carry the causal left halo from the previous
      L-tile of the same (batch, channel-block).  Correctness relies on the L
      grid axis being innermost and sequential ("arbitrary") and on the j == 0
      zeroing isolating consecutive (batch, channel-block) sweeps.
    """
    c_in, tl = x_ref.shape
    c_out = o_ref.shape[0]
    j = pl.program_id(2)

    if halo > 0:
        xf_ref = scratch[0]
        base = halo_pad - halo

        @pl.when(j == 0)
        def _zero_left_halo():
            xf_ref[:, :halo_pad] = jnp.zeros((c_in, halo_pad), scratch_dtype)

        # Single lane-aligned store of the tile (and, for the depthwise path,
        # the single f32 cast, hoisted out of the k loop).
        xf_ref[:, halo_pad:] = x_ref[...].astype(scratch_dtype)

        def window(ci0, ci1, k):
            off = base + k * dilation
            return xf_ref[ci0:ci1, off:off + tl]
    else:
        def window(ci0, ci1, k):
            return x_ref[ci0:ci1, :]

    if depthwise:
        # groups == C_in == C_out: VPU shifted multiply-accumulate in f32
        # (the MXU would only see K-wide contractions here).
        w32 = w_ref[...].astype(jnp.float32)                      # (C, K)
        acc = jnp.zeros((c_in, tl), jnp.float32)
        for k in range(kernel_size):
            xs = window(0, c_in, k).astype(jnp.float32)           # no-op cast when halo > 0
            acc = acc + xs * w32[:, k:k + 1]
        o_ref[...] = (acc + b_ref[...]).astype(o_ref.dtype)
    else:
        # Grouped / pointwise path: fold K into one MXU contraction per group;
        # concatenate group results so the output is one unmasked full store.
        cin_g = c_in // groups
        cout_g = c_out // groups
        outs = []
        for g in range(groups):
            ci0 = g * cin_g
            co0 = g * cout_g
            if kernel_size == 1:
                stacked = window(ci0, ci0 + cin_g, 0)
            else:
                stacked = jnp.concatenate(
                    [window(ci0, ci0 + cin_g, k) for k in range(kernel_size)],
                    axis=0)                                       # (K*cin_g, TL)
            acc = jnp.dot(w_ref[co0:co0 + cout_g, :], stacked,
                          preferred_element_type=jnp.float32)
            outs.append(acc + b_ref[co0:co0 + cout_g, :])
        out = outs[0] if groups == 1 else jnp.concatenate(outs, axis=0)
        o_ref[...] = out.astype(o_ref.dtype)

    if halo > 0 and carry:
        # Carry the last `halo` input columns to the left slot for the next
        # L-tile of the same (batch, channel-block).  Requires tl >= halo
        # (enforced in the wrapper) and a sequential L axis.
        xf_ref[:, base:halo_pad] = xf_ref[:, halo_pad + tl - halo:]


def causal_conv1d(x, weight, bias, *, dilation=1, groups=1, block_l=None,
                  compute_dtype=None):
    """Causal conv: F.pad(x, ((K-1)*dilation, 0)) followed by nn.Conv1d.

    x: (N, C_in, L), weight: (C_out, C_in // groups, K), bias: (C_out,).
    For inference on v6e/v7x, compute_dtype=jnp.bfloat16 roughly halves HBM
    traffic (the kernel still accumulates in fp32; default keeps exact fp32
    semantics of the PyTorch module).
    """
    n, c_in, seq_len = x.shape
    c_out, cin_g, k = weight.shape
    assert c_in == cin_g * groups and c_out % groups == 0
    halo = (k - 1) * dilation
    out_dtype = x.dtype

    if compute_dtype is not None:
        x = x.astype(compute_dtype)
        weight = weight.astype(compute_dtype)
    itemsize = jnp.dtype(x.dtype).itemsize

    depthwise = groups > 1 and groups == c_in and c_out == c_in
    # TODO(synk): channel-multiplier depthwise (groups == C_in, C_out == m*C_in,
    # m > 1) still takes the grouped MXU path; a VPU multiplier fast path would
    # avoid C_in tiny (m, K) x (K, TL) dots.

    vmem_phys = _vmem_capacity_bytes()
    tl = _choose_block_l(seq_len, halo, block_l, c_in, itemsize, vmem_phys)
    num_tiles = -(-seq_len // tl)
    carry = num_tiles > 1
    if carry:
        assert tl >= halo, ("block_l must cover the causal halo when tiling", tl, halo)
    l_total = num_tiles * tl
    if l_total != seq_len:
        # Right-pad only; the conv is causal so outputs < seq_len never see it.
        x = jnp.pad(x, ((0, 0), (0, 0), (0, l_total - seq_len)))

    halo_pad = _round_up(halo, 128) if halo > 0 else 0
    scratch_dtype = jnp.float32 if depthwise else x.dtype

    # Fold K into the contraction dim: w_folded[co, k*cin_g + ci] = w[co, ci, k].
    w_folded = jnp.transpose(weight, (0, 2, 1)).reshape(c_out, k * cin_g)
    bias2d = bias.reshape(c_out, 1).astype(jnp.float32)

    # Channel-block grid axis: gives v7x's second TensorCore independent work
    # when N == 1 (depthwise channels are fully independent).  It stays outside
    # the sequential L axis so the halo carry remains per (batch, channel-block).
    c_blocks = 1
    if depthwise and n == 1 and c_in % 16 == 0:
        c_blocks = 2
    cb_ch = c_in // c_blocks

    if depthwise:
        x_spec = pl.BlockSpec((pl.Squeezed(), cb_ch, tl),
                              lambda b, cblk, j: (b, cblk, j))
        w_spec = pl.BlockSpec((cb_ch, k * cin_g), lambda b, cblk, j: (cblk, 0))
        b_spec = pl.BlockSpec((cb_ch, 1), lambda b, cblk, j: (cblk, 0))
        o_spec = pl.BlockSpec((pl.Squeezed(), cb_ch, tl),
                              lambda b, cblk, j: (b, cblk, j))
        scr_ch = cb_ch
    else:
        x_spec = pl.BlockSpec((pl.Squeezed(), c_in, tl),
                              lambda b, cblk, j: (b, 0, j))
        w_spec = pl.BlockSpec((c_out, k * cin_g), lambda b, cblk, j: (0, 0))
        b_spec = pl.BlockSpec((c_out, 1), lambda b, cblk, j: (0, 0))
        o_spec = pl.BlockSpec((pl.Squeezed(), c_out, tl),
                              lambda b, cblk, j: (b, 0, j))
        scr_ch = c_in

    scratch_shapes = []
    if halo > 0:
        scratch_shapes.append(pltpu.VMEM((scr_ch, halo_pad + tl), scratch_dtype))

    kern = functools.partial(
        _causal_conv1d_kernel, kernel_size=k, dilation=dilation, groups=groups,
        depthwise=depthwise, halo=halo, halo_pad=halo_pad, carry=carry,
        scratch_dtype=scratch_dtype)

    # Scoped-VMEM estimate: double-buffered x/out tiles + window scratch +
    # in-kernel temporaries (accumulator / stacked slab) + resident constants.
    out_isz = jnp.dtype(out_dtype).itemsize
    if depthwise:
        tile_x = cb_ch * tl * itemsize
        tile_o = cb_ch * tl * out_isz
        scr_b = cb_ch * (halo_pad + tl) * 4 if halo > 0 else 0
        work_b = 2 * cb_ch * tl * 4
    else:
        tile_x = c_in * tl * itemsize
        tile_o = c_out * tl * out_isz
        scr_b = c_in * (halo_pad + tl) * itemsize if halo > 0 else 0
        work_b = c_out * tl * 4 + k * cin_g * tl * itemsize
    const_b = 2 * (c_out * k * cin_g * itemsize + c_out * 4)
    est = 2 * (tile_x + tile_o) + scr_b + work_b + const_b
    # Never set the limit below any platform default (16/32 MiB); when raising
    # it, keep >= 8 MiB headroom below physical VMEM (64 MiB on v7x).
    vmem_limit = None
    if est > (12 << 20):
        cap = max(min(vmem_phys - (8 << 20), 100 << 20), 32 << 20)
        vmem_limit = int(min(max(2 * est, 32 << 20), cap))

    cost = pl.CostEstimate(
        flops=int(2 * n * c_out * k * cin_g * l_total),
        transcendentals=0,
        bytes_accessed=int(x.size * itemsize
                           + w_folded.size * itemsize
                           + bias2d.size * 4
                           + n * c_out * l_total * out_isz))

    out = pl.pallas_call(
        kern,
        out_shape=jax.ShapeDtypeStruct((n, c_out, l_total), out_dtype),
        grid=(n, c_blocks, num_tiles),
        in_specs=[x_spec, w_spec, b_spec],
        out_specs=o_spec,
        scratch_shapes=scratch_shapes,
        compiler_params=pltpu.CompilerParams(
            dimension_semantics=("parallel", "parallel", "arbitrary"),
            vmem_limit_bytes=vmem_limit),
        cost_estimate=cost,
    )(x, w_folded, bias2d)

    if l_total != seq_len:
        out = out[:, :, :seq_len]
    return out


def _ref_causal_conv1d(x, weight, bias, *, dilation, groups):
    k = weight.shape[-1]
    halo = (k - 1) * dilation
    x_pad = jnp.pad(x, ((0, 0), (0, 0), (halo, 0)))
    y = jax.lax.conv_general_dilated(
        x_pad, weight, window_strides=(1,), padding="VALID",
        rhs_dilation=(dilation,), dimension_numbers=("NCH", "OIH", "NCH"),
        feature_group_count=groups, precision=jax.lax.Precision.HIGHEST)
    return y + bias[None, :, None]


if __name__ == "__main__":
    key = jax.random.PRNGKey(0)

    def make_case(ck, n, c_in, c_out, seq, ksize, groups):
        kx, kw, kb = jax.random.split(ck, 3)
        x = jax.random.normal(kx, (n, c_in, seq), dtype=jnp.float32)
        w = jax.random.normal(kw, (c_out, c_in // groups, ksize),
                              dtype=jnp.float32) * 0.1
        b = jax.random.normal(kb, (c_out,), dtype=jnp.float32) * 0.1
        return x, w, b

    # (name, N, C_in, C_out, L, K, dilation, groups, block_l, compute_dtype, tol)
    cases = [
        ("pointwise_k1",        2, 16, 32, 256, 1, 1,  1,  128, None,         2e-3),
        ("full_k3_multitile",   2, 16, 32, 320, 3, 2,  1,  128, None,         2e-3),
        ("grouped_g2",          2, 16, 32, 256, 3, 1,  2,  128, None,         2e-3),
        ("depthwise",           2, 16, 16, 256, 3, 4, 16,  128, None,         2e-3),
        ("depthwise_n1_2tc",    1, 16, 16, 384, 3, 2, 16,  128, None,         2e-3),
        ("auto_tile_long_halo", 2,  8,  8,  64, 9, 16, 1, None, None,         2e-3),
        ("full_k3_bf16",        2, 16, 32, 256, 3, 2,  1,  128, jnp.bfloat16, 6e-2),
    ]

    keys = jax.random.split(key, len(cases))
    for (name, n, ci, co, L, K, dil, g, bl, cdt, tol), ck in zip(cases, keys):
        x, w, b = make_case(ck, n, ci, co, L, K, g)
        out = causal_conv1d(x, w, b, dilation=dil, groups=g, block_l=bl,
                            compute_dtype=cdt)
        out = jax.block_until_ready(out)
        ref = _ref_causal_conv1d(x, w, b, dilation=dil, groups=g)
        assert out.shape == (n, co, L), (name, out.shape)
        err = float(jnp.max(jnp.abs(out.astype(jnp.float32) - ref)))
        assert jnp.allclose(out.astype(jnp.float32), ref,
                            atol=tol, rtol=tol), (name, err)

    print("KERNEL_OK")
</pallas_src>

<mosaic_0001>
module attributes {stable_mosaic.version = 11 : i64} {
  func.func @_causal_conv1d_kernel(%arg0: i32, %arg1: i32, %arg2: i32, %arg3: memref<1x16x128xf32, #tpu.memory_space<vmem>>, %arg4: memref<32x16xf32, #tpu.memory_space<vmem>>, %arg5: memref<32x1xf32, #tpu.memory_space<vmem>>, %arg6: memref<1x32x128xf32, #tpu.memory_space<vmem>>) attributes {dimension_semantics = [#tpu.dimension_semantics<parallel>, #tpu.dimension_semantics<parallel>, #tpu.dimension_semantics<arbitrary>], iteration_bounds = array<i64: 2, 1, 2>, scalar_prefetch = 0 : i64, scratch_operands = 0 : i64, tpu.core_type = #tpu.core_type<tc>, window_params = [{transform_indices = @transform_0, window_bounds = array<i64: 1, 16, 128>}, {pipeline_mode = #tpu.pipeline_mode<synchronous>, transform_indices = @transform_1, window_bounds = array<i64: 32, 16>}, {pipeline_mode = #tpu.pipeline_mode<synchronous>, transform_indices = @transform_2, window_bounds = array<i64: 32, 1>}, {transform_indices = @transform_3, window_bounds = array<i64: 1, 32, 128>}]} {
    %c0 = arith.constant 0 : index
    %c0_0 = arith.constant 0 : index
    %c0_1 = arith.constant 0 : index
    %0 = vector.load %arg3[%c0, %c0_0, %c0_1] : memref<1x16x128xf32, #tpu.memory_space<vmem>>, vector<1x16x128xf32>
    %1 = vector.shape_cast %0 : vector<1x16x128xf32> to vector<16x128xf32>
    %c0_2 = arith.constant 0 : index
    %c0_3 = arith.constant 0 : index
    %2 = vector.load %arg4[%c0_2, %c0_3] : memref<32x16xf32, #tpu.memory_space<vmem>>, vector<32x16xf32>
    %cst = arith.constant dense<0.000000e+00> : vector<32x128xf32>
    %3 = tpu.matmul %2, %1, %cst {dimension_numbers = #tpu.dot_dimension_numbers<[1], [0], [0], [1], [0, 0, 1, 1], [], []>} : vector<32x16xf32>, vector<16x128xf32>, vector<32x128xf32> -> vector<32x128xf32>
    %c0_4 = arith.constant 0 : index
    %c0_5 = arith.constant 0 : index
    %4 = vector.load %arg5[%c0_4, %c0_5] : memref<32x1xf32, #tpu.memory_space<vmem>>, vector<32x1xf32>
    %5 = vector.broadcast %4 : vector<32x1xf32> to vector<32x128xf32>
    %6 = arith.addf %3, %5 : vector<32x128xf32>
    %c0_6 = arith.constant 0 : index
    %c0_7 = arith.constant 0 : index
    %c0_8 = arith.constant 0 : index
    %7 = vector.load %arg6[%c0_6, %c0_7, %c0_8] : memref<1x32x128xf32, #tpu.memory_space<vmem>>, vector<1x32x128xf32>
    %8 = vector.shape_cast %7 : vector<1x32x128xf32> to vector<32x128xf32>
    %9 = vector.shape_cast %6 : vector<32x128xf32> to vector<1x32x128xf32>
    tpu.vector_store %arg6[%c0_6, %c0_7, %c0_8], %9 {strides = array<i32>} : memref<1x32x128xf32, #tpu.memory_space<vmem>>, vector<1x32x128xf32>,
    return
  }
  func.func @transform_0(%arg0: i32, %arg1: i32, %arg2: i32) -> (i32, i32, i32) {
    %c0_i32 = arith.constant 0 : i32
    %c0_i32_0 = arith.constant 0 : i32
    return %arg0, %c0_i32, %arg2 : i32, i32, i32
  }
  func.func @transform_1(%arg0: i32, %arg1: i32, %arg2: i32) -> (i32, i32) {
    %c0_i32 = arith.constant 0 : i32
    %c0_i32_0 = arith.constant 0 : i32
    %c0_i32_1 = arith.constant 0 : i32
    return %c0_i32, %c0_i32_0 : i32, i32
  }
  func.func @transform_2(%arg0: i32, %arg1: i32, %arg2: i32) -> (i32, i32) {
    %c0_i32 = arith.constant 0 : i32
    %c0_i32_0 = arith.constant 0 : i32
    %c0_i32_1 = arith.constant 0 : i32
    return %c0_i32, %c0_i32_0 : i32, i32
  }
  func.func @transform_3(%arg0: i32, %arg1: i32, %arg2: i32) -> (i32, i32, i32) {
    %c0_i32 = arith.constant 0 : i32
    %c0_i32_0 = arith.constant 0 : i32
    return %arg0, %c0_i32, %arg2 : i32, i32, i32
  }
}

</mosaic_0001>

<llo_original>
// kernel: tpu_custom_call.1
$region0: #{tpu_custom_call.1}
  #allocation0 [shape = 'u32[]', space=smem, size = 0x4, offset = 0x4, fixed_abs, tag = 'smem constant byte address 0x4 - core index']
  #allocation1 [shape = 'u32[144,128]{1,0:T(1,128)}', space=vmem, size = 0x12000, scoped, tag = 'internal scratch']
  %s0 = inlined_call_operand.vmem [shape: f32[2,16,256], index: 0, kind: input, shape index: {}]
  %s1 = inlined_call_operand.vmem [shape: f32[32,16], index: 1, kind: input, shape index: {}]
  %s2 = inlined_call_operand.vmem [shape: f32[32,1], index: 2, kind: input, shape index: {}]
  %s3 = inlined_call_operand.hbm [shape: f32[2,32,256], index: 3, kind: output, shape index: {}]
  %s4 = sld [smem:[#allocation0]]
  $region83: #{tpu_custom_call.1} parent=0
    _
  %s6 = ssub.s32 1, %s4
  %s7 = scalar_select 0, %s6, %s4
  $region1: #{tpu_custom_call.1} parent=0
    #allocation2 [shape = 'u8[16384]{0}', space=vmem, size = 0x4000, scoped, tag = 'input window, operand 0']
    #allocation3 [shape = 'u8[32768]{0}', space=vmem, size = 0x8000, scoped, tag = 'output window, operand 0']
    #allocation4 [shape = 's32[2]{0}', space=sflag, size = 0x8, scoped, tag = 'scoped memory for tpu_custom_call.1']
    %8 = vsyncpa [#allocation4], 0
    %s9 = scalar_lea.sflag [#allocation4], 1
    %10 = vsyncpa %s9, 0
    loop: start=0, step=1, limit=6
    $region2: #{tpu_custom_call.1} parent=1 // loop_pre_header
      _
    $region3: #{tpu_custom_call.1} parent=1 // loop_header
      %s12 = sphi 0, %s16
      %p13 = scmp.ge.s32.totalorder %s12, 6
      %s19 = sphi 0, %s38
      %s20 = sphi 0, %s34
      %s21 = sphi 0, %s30
      %s22 = sphi 0, %s19
      %s23 = sphi 0, %s20
      %s24 = sphi 0, %s21
      %s25 = sphi 0, %s22
      %s26 = sphi 0, %s23
      %s27 = sphi 0, %s24
      %s43 = sphi 0, %s45
      %s46 = sphi 0, %s43
      %s47 = sphi 0, %s46
      %s63 = sphi 0, %s47
      %s67 = sphi 0, %s67
      %s69 = sphi 0, %s67
      %s70 = sphi 0, %s69
      %s84 = sphi 0, %s70
      %s88 = sphi 0, %s88
      %s90 = sphi 0, %s88
      %s91 = sphi 0, %s90
      %s105 = sphi 0, %s91
      %s113 = sphi 0, %s115
      %s116 = sphi 0, %s113
      %s117 = sphi 0, %s116
      %s133 = sphi 0, %s117
    $region4: #{tpu_custom_call.1} parent=1 // loop_header_branch
      %15 = sbr.rel (%p13) target = $region8
    $region5: #{tpu_custom_call.1} parent=1 // loop_body
      %s17 = ssub.s32 %s12, 1
      %s18 = ssub.s32 %s12, 2
      %s28 = sadd.s32 1, %s21
      %p29 = scmp.ge.s32.totalorder %s28, 2
      %s30 = scalar_select %p29, 0, %s28
      %s31 = sadd.s32 1, %s20
      %s32 = scalar_select %p29, %s31, %s20
      %p33 = scmp.ge.s32.totalorder %s32, 1
      %s34 = scalar_select %p33, 0, %s32
      %s35 = sadd.s32 1, %s19
      %s36 = scalar_select %p33, %s35, %s19
      %p37 = scmp.ge.s32.totalorder %s36, 2
      %s38 = scalar_select %p37, 0, %s36
      %s39 = ssub.s32 %s19, %s38
      %s40 = ssub.s32 %s21, %s30
      %s41 = sor.u32 %s39, %s40
      %p42 = scmp.eq.s32.totalorder %s41, 0
      %s44 = sadd.s32 %s43, 1
      %s45 = scalar_select %p42, %s43, %s44
      %p48 = pneg %p42
      %p49 = scmp.eq.s32.totalorder %s12, 3
      %p50 = por %p48, %p49
      %p51 = scmp.ne.s32.totalorder %s43, %s46
      %p52 = scmp.eq.s32.totalorder %s12, 0
      %p53 = por %p51, %p52
      %p54 = scmp.ne.s32.totalorder %s43, %s46
      %p55 = scmp.eq.s32.totalorder %s17, 3
      %p56 = por %p54, %p55
      %p57 = scmp.ne.s32.totalorder %s46, %s47
      %p58 = scmp.eq.s32.totalorder %s17, 0
      %p59 = por %p57, %p58
      %p60 = scmp.ne.s32.totalorder %s46, %s47
      %p61 = scmp.eq.s32.totalorder %s18, 3
      %p62 = por %p60, %p61
      %p64 = scmp.ne.s32.totalorder %s47, %s63
      %p65 = scmp.eq.s32.totalorder %s18, 0
      %p66 = por %p64, %p65
      %s68 = sadd.s32 %s67, 1
      %p71 = scmp.eq.s32.totalorder %s12, 3
      %p72 = scmp.ne.s32.totalorder %s67, %s69
      %p73 = scmp.eq.s32.totalorder %s12, 0
      %p74 = por %p72, %p73
      %p75 = scmp.ne.s32.totalorder %s67, %s69
      %p76 = scmp.eq.s32.totalorder %s17, 3
      %p77 = por %p75, %p76
      %p78 = scmp.ne.s32.totalorder %s69, %s70
      %p79 = scmp.eq.s32.totalorder %s17, 0
      %p80 = por %p78, %p79
      %p81 = scmp.ne.s32.totalorder %s69, %s70
      %p82 = scmp.eq.s32.totalorder %s18, 3
      %p83 = por %p81, %p82
      %p85 = scmp.ne.s32.totalorder %s70, %s84
      %p86 = scmp.eq.s32.totalorder %s18, 0
      %p87 = por %p85, %p86
      %s89 = sadd.s32 %s88, 1
      %p92 = scmp.eq.s32.totalorder %s12, 3
      %p93 = scmp.ne.s32.totalorder %s88, %s90
      %p94 = scmp.eq.s32.totalorder %s12, 0
      %p95 = por %p93, %p94
      %p96 = scmp.ne.s32.totalorder %s88, %s90
      %p97 = scmp.eq.s32.totalorder %s17, 3
      %p98 = por %p96, %p97
      %p99 = scmp.ne.s32.totalorder %s90, %s91
      %p100 = scmp.eq.s32.totalorder %s17, 0
      %p101 = por %p99, %p100
      %p102 = scmp.ne.s32.totalorder %s90, %s91
      %p103 = scmp.eq.s32.totalorder %s18, 3
      %p104 = por %p102, %p103
      %p106 = scmp.ne.s32.totalorder %s91, %s105
      %p107 = scmp.eq.s32.totalorder %s18, 0
      %p108 = por %p106, %p107
      %s109 = ssub.s32 %s19, %s38
      %s110 = ssub.s32 %s21, %s30
      %s111 = sor.u32 %s109, %s110
      %p112 = scmp.eq.s32.totalorder %s111, 0
      %s114 = sadd.s32 %s113, 1
      %s115 = scalar_select %p112, %s113, %s114
      %p118 = pneg %p112
      %p119 = scmp.eq.s32.totalorder %s12, 3
      %p120 = por %p118, %p119
      %p121 = scmp.ne.s32.totalorder %s113, %s116
      %p122 = scmp.eq.s32.totalorder %s12, 0
      %p123 = por %p121, %p122
      %p124 = scmp.ne.s32.totalorder %s113, %s116
      %p125 = scmp.eq.s32.totalorder %s17, 3
      %p126 = por %p124, %p125
      %p127 = scmp.ne.s32.totalorder %s116, %s117
      %p128 = scmp.eq.s32.totalorder %s17, 0
      %p129 = por %p127, %p128
      %p130 = scmp.ne.s32.totalorder %s116, %s117
      %p131 = scmp.eq.s32.totalorder %s18, 3
      %p132 = por %p130, %p131
      %p134 = scmp.ne.s32.totalorder %s117, %s133
      %p135 = scmp.eq.s32.totalorder %s18, 0
      %p136 = por %p134, %p135
      %p137 = scmp.le.s32.totalorder 1, %s12
      %p138 = scmp.lt.s32.totalorder %s12, 5
      %p139 = pnand %p137, %p138
      %p140 = pneg %p139
      // Predicated region
      $region9: #{tpu_custom_call.1} parent=5 // pred_check
        _
      $region10: #{tpu_custom_call.1} parent=5 // pred_check_branch
        %142 = sbr.rel (%p139) target = $region12
      $region11: #{tpu_custom_call.1} parent=5 // pred_region
        %s143 = ssub.s32 %s12, 1
        // Predicated region
        $region13: #{tpu_custom_call.1} parent=11 // pred_check
          %p144 = pneg %p80
        $region14: #{tpu_custom_call.1} parent=11 // pred_check_branch
          %146 = sbr.rel (%p144) target = $region16
        $region15: #{tpu_custom_call.1} parent=11 // pred_region
          _
        $region16: #{tpu_custom_call.1} parent=11 // pred_fallthru
          _
        // Predicated region
        $region17: #{tpu_custom_call.1} parent=11 // pred_check
          %p147 = pneg %p101
        $region18: #{tpu_custom_call.1} parent=11 // pred_check_branch
          %149 = sbr.rel (%p147) target = $region20
        $region19: #{tpu_custom_call.1} parent=11 // pred_region
          _
        $region20: #{tpu_custom_call.1} parent=11 // pred_fallthru
          _
      $region12: #{tpu_custom_call.1} parent=5 // pred_fallthru
        _
      %p150 = scmp.lt.s32.totalorder %s12, 4
      // Predicated region
      $region21: #{tpu_custom_call.1} parent=5 // pred_check
        %p151 = pneg %p150
      $region22: #{tpu_custom_call.1} parent=5 // pred_check_branch
        %153 = sbr.rel (%p151) target = $region24
      $region23: #{tpu_custom_call.1} parent=5 // pred_region
        // Predicated region
        $region25: #{tpu_custom_call.1} parent=23 // pred_check
          %p154 = pneg %p53
        $region26: #{tpu_custom_call.1} parent=23 // pred_check_branch
          %156 = sbr.rel (%p154) target = $region28
        $region27: #{tpu_custom_call.1} parent=23 // pred_region
          %s157 = sand.u32 %s43, 1
          %s158 = sand.u32 %s43, 1
          %s159 = smul.addr %s158, 16
          %s160 = scalar_lea.vmem [#allocation2], %s159
          %s161 = smul.addr %s19, 4
          %s162 = sadd.s32 %s21, %s161
          %s163 = smul.addr %s162, 8
          %s164 = scalar_lea.vmem %s0, %s163
          // Predicated region
          $region29: #{tpu_custom_call.1} parent=27 // pred_check
            _
          $region30: #{tpu_custom_call.1} parent=27 // pred_check_branch
            %166 = sbr.rel (0) target = $region32
          $region31: #{tpu_custom_call.1} parent=27 // pred_region
            // Predicated region
            $region33: #{tpu_custom_call.1} parent=31 // pred_check
              _
            $region34: #{tpu_custom_call.1} parent=31 // pred_check_branch
              %168 = sbr.rel (0) target = $region36
            $region35: #{tpu_custom_call.1} parent=31 // pred_region
              // Predicated region
              $region48: #{tpu_custom_call.1} parent=35 // pred_check
                _
              $region49: #{tpu_custom_call.1} parent=35 // pred_check_branch
                %185 = sbr.rel (0) target = $region51
              $region50: #{tpu_custom_call.1} parent=35 // pred_region
                loop: start=0, step=1, limit=1
                $region52: #{tpu_custom_call.1} parent=50 // loop_pre_header
                  _
                $region53: #{tpu_custom_call.1} parent=50 // loop_header
                  %s187 = sphi 0, %s191
                  %p188 = scmp.ge.s32.totalorder %s187, 1
                  %s192 = sphi %s164, %s164
                  %s193 = sphi %s160, %s160
                $region54: #{tpu_custom_call.1} parent=50 // loop_header_branch
                  %190 = sbr.rel (%p188) target = $region58
                $region55: #{tpu_custom_call.1} parent=50 // loop_body
                  %v194 = vld [vmem:[%s192] sm:$0xff]
                  %195 = vst [vmem:[%s193] sm:$0xff] %v194
                  %v196 = vld [vmem:[%s192 + $0x10] sm:$0xff]
                  %197 = vst [vmem:[%s193 + $0x8] sm:$0xff] %v196
                $region56: #{tpu_custom_call.1} parent=50 // loop_footer
                  %s191 = sadd.s32 1, %s187
                $region57: #{tpu_custom_call.1} parent=50 // loop_footer_branch
                  %186 = sbr.rel target = $region53
                $region58: #{tpu_custom_call.1} parent=50 // loop_exit
                  _
              $region51: #{tpu_custom_call.1} parent=35 // pred_fallthru
                _
              // Predicated region
              $region59: #{tpu_custom_call.1} parent=35 // pred_check
                _
              $region60: #{tpu_custom_call.1} parent=35 // pred_check_branch
                %199 = sbr.rel target = $region62
              $region61: #{tpu_custom_call.1} parent=35 // pred_region
                _
              $region62: #{tpu_custom_call.1} parent=35 // pred_fallthru
                _
            $region36: #{tpu_custom_call.1} parent=31 // pred_fallthru
              _
            // Predicated region
            $region37: #{tpu_custom_call.1} parent=31 // pred_check
              _
            $region38: #{tpu_custom_call.1} parent=31 // pred_check_branch
              %170 = sbr.rel target = $region40
            $region39: #{tpu_custom_call.1} parent=31 // pred_region
              loop: start=0, step=1, limit=1
              $region41: #{tpu_custom_call.1} parent=39 // loop_pre_header
                _
              $region42: #{tpu_custom_call.1} parent=39 // loop_header
                %s173 = sphi 0, %s177
                %p174 = scmp.ge.s32.totalorder %s173, 1
                %s178 = sphi %s164, %s164
                %s179 = sphi %s160, %s160
              $region43: #{tpu_custom_call.1} parent=39 // loop_header_branch
                %176 = sbr.rel (%p174) target = $region47
              $region44: #{tpu_custom_call.1} parent=39 // loop_body
                %v180 = vld [vmem:[%s178] sm:$0xff]
                %181 = vst [vmem:[%s179] sm:$0xff] %v180
                %v182 = vld [vmem:[%s178 + $0x10] sm:$0xff]
                %183 = vst [vmem:[%s179 + $0x8] sm:$0xff] %v182
              $region45: #{tpu_custom_call.1} parent=39 // loop_footer
                %s177 = sadd.s32 1, %s173
              $region46: #{tpu_custom_call.1} parent=39 // loop_footer_branch
                %172 = sbr.rel target = $region42
              $region47: #{tpu_custom_call.1} parent=39 // loop_exit
                _
            $region40: #{tpu_custom_call.1} parent=31 // pred_fallthru
              _
          $region32: #{tpu_custom_call.1} parent=27 // pred_fallthru
            _
          %200 = vnop
        $region28: #{tpu_custom_call.1} parent=23 // pred_fallthru
          _
      $region24: #{tpu_custom_call.1} parent=5 // pred_fallthru
        _
      %p201 = scmp.le.s32.totalorder 1, %s12
      %p202 = scmp.lt.s32.totalorder %s12, 5
      %p203 = pnand %p201, %p202
      %p204 = pneg %p203
      // Predicated region
      $region63: #{tpu_custom_call.1} parent=5 // pred_check
        _
      $region64: #{tpu_custom_call.1} parent=5 // pred_check_branch
        %206 = sbr.rel (%p203) target = $region66
      $region65: #{tpu_custom_call.1} parent=5 // pred_region
        %s207 = ssub.s32 %s12, 1
        %s208 = sand.u32 %s46, 1
        %s209 = sand.u32 %s46, 1
        %s210 = smul.addr %s209, 16
        %s211 = scalar_lea.vmem [#allocation2], %s210
        // Predicated region
        $region67: #{tpu_custom_call.1} parent=65 // pred_check
          %p212 = pneg %p59
        $region68: #{tpu_custom_call.1} parent=65 // pred_check_branch
          %214 = sbr.rel (%p212) target = $region70
        $region69: #{tpu_custom_call.1} parent=65 // pred_region
          _
        $region70: #{tpu_custom_call.1} parent=65 // pred_fallthru
          _
        %s215 = sand.u32 %s46, 1
        %s216 = sand.u32 %s46, 1
        %s217 = smul.addr %s216, 16
        %s218 = scalar_lea.vmem [#allocation2], %s217
        %p219 = pneg %p59
        %p220 = pneg %p56
        %p221 = pneg %p80
        %p222 = pneg %p77
        %p223 = pneg %p101
        %p224 = pneg %p98
        %p225 = pneg %p129
        %p226 = pneg %p126
        %s227 = sand.u32 %s116, 1
        %s228 = scalar_lea.sflag [#allocation4], %s227
        %s229 = sand.u32 %s116, 1
        %s230 = smul.addr %s229, 32
        %s231 = scalar_lea.vmem [#allocation3], %s230
        %v232 = vld [vmem:[%s211] sm:$0xff]
        %v233 = vld [vmem:[%s211 + $0x8] sm:$0xff]
        %v234 = vld [vmem:[%s1] sm:$0xff]
        %v235 = vld [vmem:[%s1 + $0x8] sm:$0xff]
        %v236 = vld [vmem:[%s1 + $0x10] sm:$0xff]
        %v237 = vld [vmem:[%s1 + $0x18] sm:$0xff]
        %v238 = vld [vmem:[%s2] sm:$0xff]
        %v239 = vld [vmem:[%s2 + $0x8] sm:$0xff]
        %v240 = vld [vmem:[%s2 + $0x10] sm:$0xff]
        %v241 = vld [vmem:[%s2 + $0x18] sm:$0xff]
        %243 = vset.pattern.permute.xlu0 0
        %244 = vperm.xlu0 %243, %v238
        %v245 = vpop.permute.xlu0 %244
        %248 = vset.pattern.permute.xlu0 0
        %249 = vperm.xlu0 %248, %v239
        %v250 = vpop.permute.xlu0 %249
        %253 = vset.pattern.permute.xlu0 0
        %254 = vperm.xlu0 %253, %v240
        %v255 = vpop.permute.xlu0 %254
        %258 = vset.pattern.permute.xlu0 0
        %259 = vperm.xlu0 %258, %v241
        %v260 = vpop.permute.xlu0 %259
        %vm262 = vcmask 130048
        %v264 = vsel %vm262, %v234, 0
        %v267 = vsel %vm262, %v235, 0
        %v270 = vsel %vm262, %v236, 0
        %v273 = vsel %vm262, %v237, 0
        %275 = vmatprep.subr.mxu0 0.0
        %276 = vmatpush1.msra.mxu0 %v232
        %277 = vmatprep.subr.mxu0 0.0
        %278 = vmatpush1.msra.mxu0 %v233
        %279 = vmatprep.subr.mxu0 0.0
        %280 = vmatpush1.msra.mxu0 0.0
        %281 = vmatprep.subr.mxu0 0.0
        %282 = vmatpush1.msra.mxu0 0.0
        %283 = vmatprep.subr.mxu0 0.0
        %284 = vmatpush1.msra.mxu0 0.0
        %285 = vmatprep.subr.mxu0 0.0
        %286 = vmatpush1.msra.mxu0 0.0
        %287 = vmatprep.subr.mxu0 0.0
        %288 = vmatpush1.msra.mxu0 0.0
        %289 = vmatprep.subr.mxu0 0.0
        %290 = vmatpush1.msra.mxu0 0.0
        %291 = vmatprep.subr.mxu0 0.0
        %292 = vmatpush1.msra.mxu0 0.0
        %293 = vmatprep.subr.mxu0 0.0
        %294 = vmatpush1.msra.mxu0 0.0
        %295 = vmatprep.subr.mxu0 0.0
        %296 = vmatpush1.msra.mxu0 0.0
        %297 = vmatprep.subr.mxu0 0.0
        %298 = vmatpush1.msra.mxu0 0.0
        %299 = vmatprep.subr.mxu0 0.0
        %300 = vmatpush1.msra.mxu0 0.0
        %301 = vmatprep.subr.mxu0 0.0
        %302 = vmatpush1.msra.mxu0 0.0
        %303 = vmatprep.subr.mxu0 0.0
        %304 = vmatpush1.msra.mxu0 0.0
        %305 = vmatprep.subr.mxu0 0.0
        %306 = vmatpush1.msra.mxu0 0.0
        %307 = vmatprep.subr.mxu0 0.0
        %308 = vmatpush1.msra.mxu0 0.0
        %309 = vmatprep.subr.mxu0 0.0
        %310 = vmatpush1.msra.mxu0 0.0
        %311 = vmatprep.subr.mxu0 0.0
        %312 = vmatpush1.msra.mxu0 0.0
        %313 = vmatprep.subr.mxu0 0.0
        %314 = vmatpush1.msra.mxu0 0.0
        %315 = vmatprep.subr.mxu0 0.0
        %316 = vmatpush1.msra.mxu0 0.0
        %317 = vmatprep.subr.mxu0 0.0
        %318 = vmatpush1.msra.mxu0 0.0
        %319 = vmatprep.subr.mxu0 0.0
        %320 = vmatpush1.msra.mxu0 0.0
        %321 = vmatprep.subr.mxu0 0.0
        %322 = vmatpush1.msra.mxu0 0.0
        %323 = vmatprep.subr.mxu0 0.0
        %324 = vmatpush1.msra.mxu0 0.0
        %325 = vmatprep.subr.mxu0 0.0
        %326 = vmatpush1.msra.mxu0 0.0
        %327 = vmatprep.subr.mxu0 0.0
        %328 = vmatpush1.msra.mxu0 0.0
        %329 = vmatprep.subr.mxu0 0.0
        %330 = vmatpush1.msra.mxu0 0.0
        %331 = vmatprep.subr.mxu0 0.0
        %332 = vmatpush1.msra.mxu0 0.0
        %333 = vmatprep.subr.mxu0 0.0
        %334 = vmatpush1.msra.mxu0 0.0
        %335 = vmatprep.subr.mxu0 0.0
        %336 = vmatpush1.msra.mxu0 0.0
        %337 = vmatprep.subr.mxu0 0.0
        %338 = vmatpush1.msra.mxu0 0.0
        %339 = vmatprep.mubr.f32.mxu0 0.0
        %340 = vmatmul.mubr.f32.gmra.mrb[0].mxu0 %v264
        %v341 = vpop.f32.mrb[0].mxu0
        %v342 = vadd.f32 %v245, %v341
        %v343 = vpop.f32.mrb[0].mxu0
        %344 = vmatprep.mubr.f32.mxu0 0.0
        %345 = vmatmul.mubr.f32.gmra.mrb[0].mxu0 %v267
        %v346 = vpop.f32.mrb[0].mxu0
        %v347 = vadd.f32 %v250, %v346
        %v348 = vpop.f32.mrb[0].mxu0
        %349 = vmatprep.mubr.f32.mxu0 0.0
        %350 = vmatmul.mubr.f32.gmra.mrb[0].mxu0 %v270
        %v351 = vpop.f32.mrb[0].mxu0
        %v352 = vadd.f32 %v255, %v351
        %v353 = vpop.f32.mrb[0].mxu0
        %354 = vmatprep.mubr.f32.mxu0 0.0
        %355 = vmatmul.mubr.f32.gmra.mrb[0].mxu0 %v273
        %v356 = vpop.f32.mrb[0].mxu0
        %v357 = vadd.f32 %v260, %v356
        %v358 = vpop.f32.mrb[0].mxu0
        %359 = vdwg.mxu0
        %360 = vst [vmem:[%s231] sm:$0xff] %v342
        %361 = vst [vmem:[%s231 + $0x8] sm:$0xff] %v347
        %362 = vst [vmem:[%s231 + $0x10] sm:$0xff] %v352
        %363 = vst [vmem:[%s231 + $0x18] sm:$0xff] %v357
        %s364 = sand.u32 %s116, 1
        %s365 = scalar_lea.sflag [#allocation4], %s364
        %s366 = sand.u32 %s116, 1
        %s367 = smul.addr %s366, 32
        %s368 = scalar_lea.vmem [#allocation3], %s367
        // Predicated region
        $region71: #{tpu_custom_call.1} parent=65 // pred_check
          %p369 = pneg %p126
        $region72: #{tpu_custom_call.1} parent=65 // pred_check_branch
          %371 = sbr.rel (%p369) target = $region74
        $region73: #{tpu_custom_call.1} parent=65 // pred_region
          %s373 = ssub.s32 512, 512
          %374 = vsyncadd %s365, %s373
          %s375 = smul.addr %s22, 8
          %s376 = sadd.s32 %s24, %s375
          %s377 = smul.addr %s376, 128
          %s378 = scalar_lea.hbm %s3, %s377
          %s379 = sshll.u32 %s368, 4
          %s380 = int_to_ptr.vmem [resolvable:$true] %s379
          %385 = dma.vmem_to_hbm [thread:$0]  %s380, 512, %s378, %s365, 128, 256, 8
        $region74: #{tpu_custom_call.1} parent=65 // pred_fallthru
          _
      $region66: #{tpu_custom_call.1} parent=5 // pred_fallthru
        _
      %p386 = scmp.le.s32.totalorder 2, %s12
      // Predicated region
      $region75: #{tpu_custom_call.1} parent=5 // pred_check
        %p387 = pneg %p386
      $region76: #{tpu_custom_call.1} parent=5 // pred_check_branch
        %389 = sbr.rel (%p387) target = $region78
      $region77: #{tpu_custom_call.1} parent=5 // pred_region
        %s390 = ssub.s32 %s12, 2
        // Predicated region
        $region79: #{tpu_custom_call.1} parent=77 // pred_check
          %p391 = pneg %p132
        $region80: #{tpu_custom_call.1} parent=77 // pred_check_branch
          %393 = sbr.rel (%p391) target = $region82
        $region81: #{tpu_custom_call.1} parent=77 // pred_region
          %s394 = sand.u32 %s117, 1
          %s395 = scalar_lea.sflag [#allocation4], %s394
          %s396 = sand.u32 %s117, 1
          %s397 = smul.addr %s396, 32
          %s398 = scalar_lea.vmem [#allocation3], %s397
          %399 = dma.done %s395, 512
        $region82: #{tpu_custom_call.1} parent=77 // pred_fallthru
          _
      $region78: #{tpu_custom_call.1} parent=5 // pred_fallthru
        _
    $region6: #{tpu_custom_call.1} parent=1 // loop_footer
      %s16 = sadd.s32 1, %s12
    $region7: #{tpu_custom_call.1} parent=1 // loop_footer_branch
      %11 = sbr.rel target = $region3
    $region8: #{tpu_custom_call.1} parent=1 // loop_exit
      _
    %400 = vsyncpa [#allocation4], 1
    %s401 = scalar_lea.sflag [#allocation4], 1
    %402 = vsyncpa %s401, 1

</llo_original>
